<compile_context>
chip_gen: v6e
topology: v6e:2x2x1
jax: 0.10.0
libtpu: 0.0.40
codegen_flags: <defaults>
</compile_context>

<pallas_src>
import math

import jax
import jax.numpy as jnp
from jax import lax
from jax.experimental import pallas as pl
from jax.experimental.pallas import tpu as pltpu


# ---------------------------------------------------------------------------
# Tiling helpers (blocks must have last two dims divisible by (8, 128) or
# equal to the full array dims).
# ---------------------------------------------------------------------------
def _row_tile(m: int) -> int:
    for t in (512, 256, 128, 64, 32, 16, 8):
        if m % t == 0:
            return t
    return m  # full extent (always legal)


def _lane_tile(n: int) -> int:
    for t in (512, 256, 128):
        if n % t == 0:
            return t
    return n  # full extent (always legal)


# ---------------------------------------------------------------------------
# Positional-encoding table (precomputed in plain JAX, matching PyTorch).
# ---------------------------------------------------------------------------
def positional_encoding_table(max_len: int, d_model: int) -> jax.Array:
    position = jnp.arange(max_len, dtype=jnp.float32)[:, None]
    div_term = jnp.exp(
        jnp.arange(0, d_model, 2, dtype=jnp.float32) * (-math.log(10000.0) / d_model)
    )
    angles = position * div_term
    pe = jnp.zeros((max_len, d_model), jnp.float32)
    pe = pe.at[:, 0::2].set(jnp.sin(angles))
    pe = pe.at[:, 1::2].set(jnp.cos(angles))
    return pe


def generate_square_subsequent_mask(sz: int) -> jax.Array:
    i = jnp.arange(sz)[:, None]
    j = jnp.arange(sz)[None, :]
    return jnp.where(j <= i, 0.0, -jnp.inf).astype(jnp.float32)


# ---------------------------------------------------------------------------
# Kernel 1: fused input projection + positional encoding (dropout == identity)
# ---------------------------------------------------------------------------
def input_proj_pe(x, w, b, pe_rows):
    """out[b, s, :] = x[b, s, :] @ w + b + pe_rows[b, :]   (PE indexed by batch,
    exactly as in the original forward where pe is applied pre-permute)."""
    B, S, F = x.shape
    D = w.shape[1]
    b2d = b.reshape(1, D)
    pe3d = pe_rows.reshape(B, 1, D)

    def kernel(x_ref, w_ref, b_ref, pe_ref, o_ref):
        h = jnp.dot(x_ref[0], w_ref[...], preferred_element_type=jnp.float32)
        h = h + b_ref[...] + pe_ref[0]          # (S,D) + (1,D) broadcasts
        o_ref[0] = h.astype(o_ref.dtype)

    return pl.pallas_call(
        kernel,
        out_shape=jax.ShapeDtypeStruct((B, S, D), x.dtype),
        grid=(B,),
        in_specs=[
            pl.BlockSpec((1, S, F), lambda i: (i, 0, 0)),
            pl.BlockSpec((F, D), lambda i: (0, 0)),
            pl.BlockSpec((1, D), lambda i: (0, 0)),
            pl.BlockSpec((1, 1, D), lambda i: (i, 0, 0)),
        ],
        out_specs=pl.BlockSpec((1, S, D), lambda i: (i, 0, 0)),
        compiler_params=pltpu.CompilerParams(dimension_semantics=("parallel",)),
    )(x, w, b2d, pe3d)


# ---------------------------------------------------------------------------
# Kernel 2: generic tiled linear  y = act(x @ w + b)
# ---------------------------------------------------------------------------
def linear_pallas(x2d, w, b, activation=None):
    M, K = x2d.shape
    K2, N = w.shape
    assert K == K2
    tm, tn, tk = _row_tile(M), _lane_tile(N), _lane_tile(K)
    b2d = b.reshape(1, N)

    def kernel(x_ref, w_ref, b_ref, o_ref, acc_ref):
        @pl.when(pl.program_id(2) == 0)
        def _init():
            acc_ref[...] = jnp.zeros_like(acc_ref)

        acc_ref[...] += jnp.dot(
            x_ref[...], w_ref[...], preferred_element_type=jnp.float32
        )

        @pl.when(pl.program_id(2) == pl.num_programs(2) - 1)
        def _finalize():
            y = acc_ref[...] + b_ref[...].astype(jnp.float32)
            if activation == "relu":
                y = jnp.maximum(y, 0.0)
            o_ref[...] = y.astype(o_ref.dtype)

    return pl.pallas_call(
        kernel,
        out_shape=jax.ShapeDtypeStruct((M, N), x2d.dtype),
        grid=(M // tm, N // tn, K // tk),
        in_specs=[
            pl.BlockSpec((tm, tk), lambda i, j, k: (i, k)),
            pl.BlockSpec((tk, tn), lambda i, j, k: (k, j)),
            pl.BlockSpec((1, tn), lambda i, j, k: (0, j)),
        ],
        out_specs=pl.BlockSpec((tm, tn), lambda i, j, k: (i, j)),
        scratch_shapes=[pltpu.VMEM((tm, tn), jnp.float32)],
        compiler_params=pltpu.CompilerParams(
            dimension_semantics=("parallel", "parallel", "arbitrary")
        ),
    )(x2d, w, b2d)


# ---------------------------------------------------------------------------
# Kernel 3: softmax attention, one (batch, head) per grid step
# ---------------------------------------------------------------------------
def attention(q, k, v, *, causal=False):
    BH, S, dh = q.shape
    scale = 1.0 / math.sqrt(dh)

    def kernel(q_ref, k_ref, v_ref, o_ref):
        qf = q_ref[0].astype(jnp.float32)
        kf = k_ref[0].astype(jnp.float32)
        vf = v_ref[0].astype(jnp.float32)
        s = jnp.einsum("qd,kd->qk", qf, kf,
                       preferred_element_type=jnp.float32) * scale
        if causal:  # == adding generate_square_subsequent_mask(S)
            row = lax.broadcasted_iota(jnp.int32, (S, S), 0)
            col = lax.broadcasted_iota(jnp.int32, (S, S), 1)
            s = jnp.where(col <= row, s, -1e30)
        m = jnp.max(s, axis=-1, keepdims=True)
        p = jnp.exp(s - m)
        l = jnp.sum(p, axis=-1, keepdims=True)
        o = jnp.dot(p, vf, preferred_element_type=jnp.float32) / l
        o_ref[0] = o.astype(o_ref.dtype)

    return pl.pallas_call(
        kernel,
        out_shape=jax.ShapeDtypeStruct((BH, S, dh), q.dtype),
        grid=(BH,),
        in_specs=[pl.BlockSpec((1, S, dh), lambda i: (i, 0, 0))] * 3,
        out_specs=pl.BlockSpec((1, S, dh), lambda i: (i, 0, 0)),
        compiler_params=pltpu.CompilerParams(dimension_semantics=("parallel",)),
    )(q, k, v)


# ---------------------------------------------------------------------------
# Kernel 4: (residual +) LayerNorm over d_model
# ---------------------------------------------------------------------------
def _ln_math(xf, g, b, eps):
    mu = jnp.mean(xf, axis=-1, keepdims=True)
    xc = xf - mu
    var = jnp.mean(xc * xc, axis=-1, keepdims=True)
    return xc * lax.rsqrt(var + eps) * g + b


def add_layer_norm(x2d, r2d, gamma, beta, eps=1e-5):
    M, D = x2d.shape
    tm = _row_tile(M)
    g2d, b2d = gamma.reshape(1, D), beta.reshape(1, D)

    def kernel(x_ref, r_ref, g_ref, b_ref, o_ref):
        xf = x_ref[...].astype(jnp.float32) + r_ref[...].astype(jnp.float32)
        o_ref[...] = _ln_math(xf, g_ref[...], b_ref[...], eps).astype(o_ref.dtype)

    return pl.pallas_call(
        kernel,
        out_shape=jax.ShapeDtypeStruct((M, D), x2d.dtype),
        grid=(M // tm,),
        in_specs=[
            pl.BlockSpec((tm, D), lambda i: (i, 0)),
            pl.BlockSpec((tm, D), lambda i: (i, 0)),
            pl.BlockSpec((1, D), lambda i: (0, 0)),
            pl.BlockSpec((1, D), lambda i: (0, 0)),
        ],
        out_specs=pl.BlockSpec((tm, D), lambda i: (i, 0)),
        compiler_params=pltpu.CompilerParams(dimension_semantics=("parallel",)),
    )(x2d, r2d, g2d, b2d)


def layer_norm(x2d, gamma, beta, eps=1e-5):
    M, D = x2d.shape
    tm = _row_tile(M)
    g2d, b2d = gamma.reshape(1, D), beta.reshape(1, D)

    def kernel(x_ref, g_ref, b_ref, o_ref):
        xf = x_ref[...].astype(jnp.float32)
        o_ref[...] = _ln_math(xf, g_ref[...], b_ref[...], eps).astype(o_ref.dtype)

    return pl.pallas_call(
        kernel,
        out_shape=jax.ShapeDtypeStruct((M, D), x2d.dtype),
        grid=(M // tm,),
        in_specs=[
            pl.BlockSpec((tm, D), lambda i: (i, 0)),
            pl.BlockSpec((1, D), lambda i: (0, 0)),
            pl.BlockSpec((1, D), lambda i: (0, 0)),
        ],
        out_specs=pl.BlockSpec((tm, D), lambda i: (i, 0)),
        compiler_params=pltpu.CompilerParams(dimension_semantics=("parallel",)),
    )(x2d, g2d, b2d)


# ---------------------------------------------------------------------------
# Full forward pass (Pallas kernels + cheap JAX layout glue between them)
# ---------------------------------------------------------------------------
def custom_transformer_decoder_forward(params, x, *, n_heads, use_mask=False):
    B, S, _ = x.shape
    D = params["w_in"].shape[1]
    dh = D // n_heads

    # dense_shape + SimplePositionalEncoding (dropout == identity)
    h = input_proj_pe(x, params["w_in"], params["b_in"], params["pe"][:B])
    h2d = h.reshape(B * S, D)

    for layer in params["layers"]:
        # --- multi-head self-attention (post-norm block) ---
        qkv = linear_pallas(h2d, layer["w_qkv"], layer["b_qkv"])       # (B*S, 3D)
        qkv = qkv.reshape(B, S, 3, n_heads, dh)
        q = qkv[:, :, 0].transpose(0, 2, 1, 3).reshape(B * n_heads, S, dh)
        k = qkv[:, :, 1].transpose(0, 2, 1, 3).reshape(B * n_heads, S, dh)
        v = qkv[:, :, 2].transpose(0, 2, 1, 3).reshape(B * n_heads, S, dh)
        a = attention(q, k, v, causal=use_mask)                         # (B*H, S, dh)
        a = a.reshape(B, n_heads, S, dh).transpose(0, 2, 1, 3).reshape(B * S, D)
        a = linear_pallas(a, layer["w_o"], layer["b_o"])
        h2d = add_layer_norm(a, h2d, layer["ln1_g"], layer["ln1_b"])
        # --- feed-forward (ReLU) ---
        f = linear_pallas(h2d, layer["w_ff1"], layer["b_ff1"], activation="relu")
        f = linear_pallas(f, layer["w_ff2"], layer["b_ff2"])
        h2d = add_layer_norm(f, h2d, layer["ln2_g"], layer["ln2_b"])

    # final encoder LayerNorm
    h2d = layer_norm(h2d, params["lnf_g"], params["lnf_b"])

    # output_dim_layer -> permute(1, 2, 0) -> out_length_lay -> view(-1, out_seq)
    od = params["w_od"].shape[1]
    y = linear_pallas(h2d, params["w_od"], params["b_od"])              # (B*S, od)
    y = y.reshape(B, S, od).transpose(0, 2, 1).reshape(B * od, S)       # (B*od, S)
    out = linear_pallas(y, params["w_len"], params["b_len"])            # (B*od, Tout)
    return out


# ---------------------------------------------------------------------------
# Parameter construction (random but deterministic; PyTorch-style uniform init)
# ---------------------------------------------------------------------------
def _dense_init(key, fan_in, fan_out):
    kw, kb = jax.random.split(key)
    lim = 1.0 / math.sqrt(fan_in)
    w = jax.random.uniform(kw, (fan_in, fan_out), jnp.float32, -lim, lim)
    b = jax.random.uniform(kb, (fan_out,), jnp.float32, -lim, lim)
    return w, b


def init_params(key, *, seq_length, n_time_series, d_model, n_layers,
                dim_feedforward, output_dim, output_seq_length, max_len=5000):
    k_in, k_od, k_len, k_layers = jax.random.split(key, 4)
    w_in, b_in = _dense_init(k_in, n_time_series, d_model)
    w_od, b_od = _dense_init(k_od, d_model, output_dim)
    w_len, b_len = _dense_init(k_len, seq_length, output_seq_length)
    layers = []
    for kl in jax.random.split(k_layers, n_layers):
        k1, k2, k3, k4 = jax.random.split(kl, 4)
        w_qkv, b_qkv = _dense_init(k1, d_model, 3 * d_model)
        w_o, b_o = _dense_init(k2, d_model, d_model)
        w_f1, b_f1 = _dense_init(k3, d_model, dim_feedforward)
        w_f2, b_f2 = _dense_init(k4, dim_feedforward, d_model)
        layers.append(dict(
            w_qkv=w_qkv, b_qkv=b_qkv, w_o=w_o, b_o=b_o,
            w_ff1=w_f1, b_ff1=b_f1, w_ff2=w_f2, b_ff2=b_f2,
            ln1_g=jnp.ones((d_model,), jnp.float32),
            ln1_b=jnp.zeros((d_model,), jnp.float32),
            ln2_g=jnp.ones((d_model,), jnp.float32),
            ln2_b=jnp.zeros((d_model,), jnp.float32),
        ))
    return dict(
        pe=positional_encoding_table(max_len, d_model),
        w_in=w_in, b_in=b_in, layers=layers,
        lnf_g=jnp.ones((d_model,), jnp.float32),
        lnf_b=jnp.zeros((d_model,), jnp.float32),
        w_od=w_od, b_od=b_od, w_len=w_len, b_len=b_len,
    )


# ---------------------------------------------------------------------------
# Pure-JAX reference (mirrors the PyTorch forward, eval mode)
# ---------------------------------------------------------------------------
def reference_forward(params, x, *, n_heads, use_mask=False):
    HP = lax.Precision.HIGHEST
    B, S, _ = x.shape
    D = params["w_in"].shape[1]
    dh = D // n_heads

    def ln(v, g, b, eps=1e-5):
        mu = v.mean(-1, keepdims=True)
        var = ((v - mu) ** 2).mean(-1, keepdims=True)
        return (v - mu) / jnp.sqrt(var + eps) * g + b

    # PE applied pre-permute -> indexed by batch axis (matches PyTorch code)
    h = (jnp.einsum("bsf,fd->bsd", x, params["w_in"], precision=HP)
         + params["b_in"] + params["pe"][:B][:, None, :])
    for layer in params["layers"]:
        qkv = jnp.einsum("bsd,de->bse", h, layer["w_qkv"], precision=HP) + layer["b_qkv"]
        qkv = qkv.reshape(B, S, 3, n_heads, dh)
        q, k, v = (qkv[:, :, i].transpose(0, 2, 1, 3) for i in range(3))
        s = jnp.einsum("bhqd,bhkd->bhqk", q, k, precision=HP) / math.sqrt(dh)
        if use_mask:
            s = s + generate_square_subsequent_mask(S)
        p = jax.nn.softmax(s, axis=-1)
        a = jnp.einsum("bhqk,bhkd->bhqd", p, v, precision=HP)
        a = a.transpose(0, 2, 1, 3).reshape(B, S, D)
        a = jnp.einsum("bsd,de->bse", a, layer["w_o"], precision=HP) + layer["b_o"]
        h = ln(h + a, layer["ln1_g"], layer["ln1_b"])
        f = jax.nn.relu(jnp.einsum("bsd,df->bsf", h, layer["w_ff1"], precision=HP)
                        + layer["b_ff1"])
        f = jnp.einsum("bsf,fd->bsd", f, layer["w_ff2"], precision=HP) + layer["b_ff2"]
        h = ln(h + f, layer["ln2_g"], layer["ln2_b"])
    h = ln(h, params["lnf_g"], params["lnf_b"])
    y = jnp.einsum("bsd,do->bso", h, params["w_od"], precision=HP) + params["b_od"]
    y = jnp.transpose(y, (0, 2, 1))                                     # (B, od, S)
    out = jnp.einsum("bos,st->bot", y, params["w_len"], precision=HP) + params["b_len"]
    return out.reshape(-1, params["w_len"].shape[1])


# ---------------------------------------------------------------------------
if __name__ == "__main__":
    B = 2
    seq_length = 8
    n_time_series = 4
    d_model = 128            # module default
    n_heads = 8              # fixed by TransformerEncoderLayer(d_model, 8)
    n_layers = 2             # small test (constructor arg n_layers_encoder)
    dim_feedforward = 2048   # PyTorch TransformerEncoderLayer default
    output_dim = 1
    output_seq_length = 4

    key = jax.random.PRNGKey(0)
    k_params, k_x = jax.random.split(key)
    params = init_params(
        k_params, seq_length=seq_length, n_time_series=n_time_series,
        d_model=d_model, n_layers=n_layers, dim_feedforward=dim_feedforward,
        output_dim=output_dim, output_seq_length=output_seq_length)
    x = jax.random.normal(k_x, (B, seq_length, n_time_series), dtype=jnp.float32)

    out = custom_transformer_decoder_forward(params, x, n_heads=n_heads,
                                             use_mask=False)
    out = jax.block_until_ready(out)

    ref = reference_forward(params, x, n_heads=n_heads, use_mask=False)
    assert out.shape == (B * output_dim, output_seq_length), out.shape
    max_err = float(jnp.max(jnp.abs(out - ref)))
    assert max_err < 2e-2, f"max abs error vs reference: {max_err}"

    print("KERNEL_OK")
</pallas_src>

<mosaic_0001>
module attributes {stable_mosaic.version = 11 : i64} {
  func.func @kernel(%arg0: i32, %arg1: memref<1x8x4xf32, #tpu.memory_space<vmem>>, %arg2: memref<4x128xf32, #tpu.memory_space<vmem>>, %arg3: memref<1x128xf32, #tpu.memory_space<vmem>>, %arg4: memref<1x1x128xf32, #tpu.memory_space<vmem>>, %arg5: memref<1x8x128xf32, #tpu.memory_space<vmem>>) attributes {dimension_semantics = [#tpu.dimension_semantics<parallel>], iteration_bounds = array<i64: 2>, scalar_prefetch = 0 : i64, scratch_operands = 0 : i64, tpu.core_type = #tpu.core_type<tc>, window_params = [{transform_indices = @transform_0, window_bounds = array<i64: 1, 8, 4>}, {pipeline_mode = #tpu.pipeline_mode<synchronous>, transform_indices = @transform_1, window_bounds = array<i64: 4, 128>}, {pipeline_mode = #tpu.pipeline_mode<synchronous>, transform_indices = @transform_2, window_bounds = array<i64: 1, 128>}, {transform_indices = @transform_3, window_bounds = array<i64: 1, 1, 128>}, {transform_indices = @transform_4, window_bounds = array<i64: 1, 8, 128>}]} {
    %c0 = arith.constant 0 : index
    %c0_0 = arith.constant 0 : index
    %c0_1 = arith.constant 0 : index
    %0 = vector.load %arg1[%c0, %c0_0, %c0_1] : memref<1x8x4xf32, #tpu.memory_space<vmem>>, vector<1x8x4xf32>
    %1 = vector.shape_cast %0 : vector<1x8x4xf32> to vector<8x4xf32>
    %c0_2 = arith.constant 0 : index
    %c0_3 = arith.constant 0 : index
    %2 = vector.load %arg2[%c0_2, %c0_3] : memref<4x128xf32, #tpu.memory_space<vmem>>, vector<4x128xf32>
    %cst = arith.constant dense<0.000000e+00> : vector<8x128xf32>
    %3 = tpu.matmul %1, %2, %cst {dimension_numbers = #tpu.dot_dimension_numbers<[1], [0], [0], [1], [0, 0, 1, 1], [], []>} : vector<8x4xf32>, vector<4x128xf32>, vector<8x128xf32> -> vector<8x128xf32>
    %c0_4 = arith.constant 0 : index
    %c0_5 = arith.constant 0 : index
    %4 = vector.load %arg3[%c0_4, %c0_5] : memref<1x128xf32, #tpu.memory_space<vmem>>, vector<1x128xf32>
    %5 = vector.broadcast %4 : vector<1x128xf32> to vector<8x128xf32>
    %6 = arith.addf %3, %5 : vector<8x128xf32>
    %c0_6 = arith.constant 0 : index
    %c0_7 = arith.constant 0 : index
    %c0_8 = arith.constant 0 : index
    %7 = vector.load %arg4[%c0_6, %c0_7, %c0_8] : memref<1x1x128xf32, #tpu.memory_space<vmem>>, vector<1x1x128xf32>
    %8 = vector.shape_cast %7 : vector<1x1x128xf32> to vector<1x128xf32>
    %9 = vector.broadcast %8 : vector<1x128xf32> to vector<8x128xf32>
    %10 = arith.addf %6, %9 : vector<8x128xf32>
    %c0_9 = arith.constant 0 : index
    %c0_10 = arith.constant 0 : index
    %c0_11 = arith.constant 0 : index
    %11 = vector.load %arg5[%c0_9, %c0_10, %c0_11] : memref<1x8x128xf32, #tpu.memory_space<vmem>>, vector<1x8x128xf32>
    %12 = vector.shape_cast %11 : vector<1x8x128xf32> to vector<8x128xf32>
    %13 = vector.shape_cast %10 : vector<8x128xf32> to vector<1x8x128xf32>
    tpu.vector_store %arg5[%c0_9, %c0_10, %c0_11], %13 {strides = array<i32>} : memref<1x8x128xf32, #tpu.memory_space<vmem>>, vector<1x8x128xf32>,
    return
  }
  func.func @transform_0(%arg0: i32) -> (i32, i32, i32) {
    %c0_i32 = arith.constant 0 : i32
    %c0_i32_0 = arith.constant 0 : i32
    %c0_i32_1 = arith.constant 0 : i32
    return %arg0, %c0_i32, %c0_i32_0 : i32, i32, i32
  }
  func.func @transform_1(%arg0: i32) -> (i32, i32) {
    %c0_i32 = arith.constant 0 : i32
    %c0_i32_0 = arith.constant 0 : i32
    %c0_i32_1 = arith.constant 0 : i32
    return %c0_i32, %c0_i32_0 : i32, i32
  }
  func.func @transform_2(%arg0: i32) -> (i32, i32) {
    %c0_i32 = arith.constant 0 : i32
    %c0_i32_0 = arith.constant 0 : i32
    %c0_i32_1 = arith.constant 0 : i32
    return %c0_i32, %c0_i32_0 : i32, i32
  }
  func.func @transform_3(%arg0: i32) -> (i32, i32, i32) {
    %c0_i32 = arith.constant 0 : i32
    %c0_i32_0 = arith.constant 0 : i32
    %c0_i32_1 = arith.constant 0 : i32
    return %arg0, %c0_i32, %c0_i32_0 : i32, i32, i32
  }
  func.func @transform_4(%arg0: i32) -> (i32, i32, i32) {
    %c0_i32 = arith.constant 0 : i32
    %c0_i32_0 = arith.constant 0 : i32
    %c0_i32_1 = arith.constant 0 : i32
    return %arg0, %c0_i32, %c0_i32_0 : i32, i32, i32
  }
}

</mosaic_0001>

<llo_original>
// kernel: tpu_custom_call.1
$region0: #{tpu_custom_call.1}
  #allocation0 [shape = 'u32[]', space=smem, size = 0x4, offset = 0x4, fixed_abs, tag = 'smem constant byte address 0x4 - core index']
  #allocation1 [shape = 'u32[144,128]{1,0:T(1,128)}', space=vmem, size = 0x12000, scoped, tag = 'internal scratch']
  %s0 = inlined_call_operand.vmem [shape: f32[2,8,4], index: 0, kind: input, shape index: {}]
  %s1 = inlined_call_operand.vmem [shape: f32[4,128], index: 1, kind: input, shape index: {}]
  %s2 = inlined_call_operand.vmem [shape: f32[1,128], index: 2, kind: input, shape index: {}]
  %s3 = inlined_call_operand.vmem [shape: f32[2,1,128], index: 3, kind: input, shape index: {}]
  %s4 = inlined_call_operand.hbm [shape: f32[2,8,128], index: 4, kind: output, shape index: {}]
  %s5 = sld [smem:[#allocation0]]
  $region49: #{tpu_custom_call.1} parent=0
    _
  %s7 = ssub.s32 1, %s5
  %s8 = scalar_select 0, %s7, %s5
  $region1: #{tpu_custom_call.1} parent=0
    #allocation2 [shape = 'u8[8192]{0}', space=vmem, size = 0x2000, scoped, tag = 'output window, operand 0']
    #allocation3 [shape = 's32[2]{0}', space=sflag, size = 0x8, scoped, tag = 'scoped memory for tpu_custom_call.1']
    %9 = vsyncpa [#allocation3], 0
    %s10 = scalar_lea.sflag [#allocation3], 1
    %11 = vsyncpa %s10, 0
    loop: start=0, step=1, limit=4
    $region2: #{tpu_custom_call.1} parent=1 // loop_pre_header
      _
    $region3: #{tpu_custom_call.1} parent=1 // loop_header
      %s13 = sphi 0, %s17
      %p14 = scmp.ge.s32.totalorder %s13, 4
      %s23 = sphi 0, %s25
      %s26 = sphi 0, %s23
      %s27 = sphi 0, %s26
      %s43 = sphi 0, %s27
      %s47 = sphi 0, %s47
      %s49 = sphi 0, %s47
      %s50 = sphi 0, %s49
      %s64 = sphi 0, %s50
      %s68 = sphi 0, %s68
      %s70 = sphi 0, %s68
      %s71 = sphi 0, %s70
      %s85 = sphi 0, %s71
      %s91 = sphi 0, %s93
      %s94 = sphi 0, %s91
      %s95 = sphi 0, %s94
      %s111 = sphi 0, %s95
      %s117 = sphi 0, %s119
      %s120 = sphi 0, %s117
      %s121 = sphi 0, %s120
      %s137 = sphi 0, %s121
    $region4: #{tpu_custom_call.1} parent=1 // loop_header_branch
      %16 = sbr.rel (%p14) target = $region8
    $region5: #{tpu_custom_call.1} parent=1 // loop_body
      %s18 = ssub.s32 %s13, 1
      %s19 = ssub.s32 %s13, 2
      %s20 = sadd.s32 %s13, 1
      %s21 = ssub.s32 %s13, %s20
      %p22 = scmp.eq.s32.totalorder %s21, 0
      %s24 = sadd.s32 %s23, 1
      %s25 = scalar_select %p22, %s23, %s24
      %p28 = pneg %p22
      %p29 = scmp.eq.s32.totalorder %s13, 1
      %p30 = por %p28, %p29
      %p31 = scmp.ne.s32.totalorder %s23, %s26
      %p32 = scmp.eq.s32.totalorder %s13, 0
      %p33 = por %p31, %p32
      %p34 = scmp.ne.s32.totalorder %s23, %s26
      %p35 = scmp.eq.s32.totalorder %s18, 1
      %p36 = por %p34, %p35
      %p37 = scmp.ne.s32.totalorder %s26, %s27
      %p38 = scmp.eq.s32.totalorder %s18, 0
      %p39 = por %p37, %p38
      %p40 = scmp.ne.s32.totalorder %s26, %s27
      %p41 = scmp.eq.s32.totalorder %s19, 1
      %p42 = por %p40, %p41
      %p44 = scmp.ne.s32.totalorder %s27, %s43
      %p45 = scmp.eq.s32.totalorder %s19, 0
      %p46 = por %p44, %p45
      %s48 = sadd.s32 %s47, 1
      %p51 = scmp.eq.s32.totalorder %s13, 1
      %p52 = scmp.ne.s32.totalorder %s47, %s49
      %p53 = scmp.eq.s32.totalorder %s13, 0
      %p54 = por %p52, %p53
      %p55 = scmp.ne.s32.totalorder %s47, %s49
      %p56 = scmp.eq.s32.totalorder %s18, 1
      %p57 = por %p55, %p56
      %p58 = scmp.ne.s32.totalorder %s49, %s50
      %p59 = scmp.eq.s32.totalorder %s18, 0
      %p60 = por %p58, %p59
      %p61 = scmp.ne.s32.totalorder %s49, %s50
      %p62 = scmp.eq.s32.totalorder %s19, 1
      %p63 = por %p61, %p62
      %p65 = scmp.ne.s32.totalorder %s50, %s64
      %p66 = scmp.eq.s32.totalorder %s19, 0
      %p67 = por %p65, %p66
      %s69 = sadd.s32 %s68, 1
      %p72 = scmp.eq.s32.totalorder %s13, 1
      %p73 = scmp.ne.s32.totalorder %s68, %s70
      %p74 = scmp.eq.s32.totalorder %s13, 0
      %p75 = por %p73, %p74
      %p76 = scmp.ne.s32.totalorder %s68, %s70
      %p77 = scmp.eq.s32.totalorder %s18, 1
      %p78 = por %p76, %p77
      %p79 = scmp.ne.s32.totalorder %s70, %s71
      %p80 = scmp.eq.s32.totalorder %s18, 0
      %p81 = por %p79, %p80
      %p82 = scmp.ne.s32.totalorder %s70, %s71
      %p83 = scmp.eq.s32.totalorder %s19, 1
      %p84 = por %p82, %p83
      %p86 = scmp.ne.s32.totalorder %s71, %s85
      %p87 = scmp.eq.s32.totalorder %s19, 0
      %p88 = por %p86, %p87
      %s89 = ssub.s32 %s13, %s20
      %p90 = scmp.eq.s32.totalorder %s89, 0
      %s92 = sadd.s32 %s91, 1
      %s93 = scalar_select %p90, %s91, %s92
      %p96 = pneg %p90
      %p97 = scmp.eq.s32.totalorder %s13, 1
      %p98 = por %p96, %p97
      %p99 = scmp.ne.s32.totalorder %s91, %s94
      %p100 = scmp.eq.s32.totalorder %s13, 0
      %p101 = por %p99, %p100
      %p102 = scmp.ne.s32.totalorder %s91, %s94
      %p103 = scmp.eq.s32.totalorder %s18, 1
      %p104 = por %p102, %p103
      %p105 = scmp.ne.s32.totalorder %s94, %s95
      %p106 = scmp.eq.s32.totalorder %s18, 0
      %p107 = por %p105, %p106
      %p108 = scmp.ne.s32.totalorder %s94, %s95
      %p109 = scmp.eq.s32.totalorder %s19, 1
      %p110 = por %p108, %p109
      %p112 = scmp.ne.s32.totalorder %s95, %s111
      %p113 = scmp.eq.s32.totalorder %s19, 0
      %p114 = por %p112, %p113
      %s115 = ssub.s32 %s13, %s20
      %p116 = scmp.eq.s32.totalorder %s115, 0
      %s118 = sadd.s32 %s117, 1
      %s119 = scalar_select %p116, %s117, %s118
      %p122 = pneg %p116
      %p123 = scmp.eq.s32.totalorder %s13, 1
      %p124 = por %p122, %p123
      %p125 = scmp.ne.s32.totalorder %s117, %s120
      %p126 = scmp.eq.s32.totalorder %s13, 0
      %p127 = por %p125, %p126
      %p128 = scmp.ne.s32.totalorder %s117, %s120
      %p129 = scmp.eq.s32.totalorder %s18, 1
      %p130 = por %p128, %p129
      %p131 = scmp.ne.s32.totalorder %s120, %s121
      %p132 = scmp.eq.s32.totalorder %s18, 0
      %p133 = por %p131, %p132
      %p134 = scmp.ne.s32.totalorder %s120, %s121
      %p135 = scmp.eq.s32.totalorder %s19, 1
      %p136 = por %p134, %p135
      %p138 = scmp.ne.s32.totalorder %s121, %s137
      %p139 = scmp.eq.s32.totalorder %s19, 0
      %p140 = por %p138, %p139
      %p141 = scmp.le.s32.totalorder 1, %s13
      %p142 = scmp.lt.s32.totalorder %s13, 3
      %p143 = pnand %p141, %p142
      %p144 = pneg %p143
      // Predicated region
      $region9: #{tpu_custom_call.1} parent=5 // pred_check
        _
      $region10: #{tpu_custom_call.1} parent=5 // pred_check_branch
        %146 = sbr.rel (%p143) target = $region12
      $region11: #{tpu_custom_call.1} parent=5 // pred_region
        %s147 = ssub.s32 %s13, 1
        // Predicated region
        $region13: #{tpu_custom_call.1} parent=11 // pred_check
          %p148 = pneg %p60
        $region14: #{tpu_custom_call.1} parent=11 // pred_check_branch
          %150 = sbr.rel (%p148) target = $region16
        $region15: #{tpu_custom_call.1} parent=11 // pred_region
          _
        $region16: #{tpu_custom_call.1} parent=11 // pred_fallthru
          _
        // Predicated region
        $region17: #{tpu_custom_call.1} parent=11 // pred_check
          %p151 = pneg %p81
        $region18: #{tpu_custom_call.1} parent=11 // pred_check_branch
          %153 = sbr.rel (%p151) target = $region20
        $region19: #{tpu_custom_call.1} parent=11 // pred_region
          _
        $region20: #{tpu_custom_call.1} parent=11 // pred_fallthru
          _
      $region12: #{tpu_custom_call.1} parent=5 // pred_fallthru
        _
      %p154 = scmp.lt.s32.totalorder %s13, 2
      // Predicated region
      $region21: #{tpu_custom_call.1} parent=5 // pred_check
        %p155 = pneg %p154
      $region22: #{tpu_custom_call.1} parent=5 // pred_check_branch
        %157 = sbr.rel (%p155) target = $region24
      $region23: #{tpu_custom_call.1} parent=5 // pred_region
        // Predicated region
        $region25: #{tpu_custom_call.1} parent=23 // pred_check
          %p158 = pneg %p33
        $region26: #{tpu_custom_call.1} parent=23 // pred_check_branch
          %160 = sbr.rel (%p158) target = $region28
        $region27: #{tpu_custom_call.1} parent=23 // pred_region
          %p161 = scmp.lt.s32.totalorder %s13, 1
          %s162 = scalar_select %p161, %s13, 1
          %s163 = smul.addr %s162, 8
          %s164 = scalar_lea.vmem %s0, %s163
        $region28: #{tpu_custom_call.1} parent=23 // pred_fallthru
          _
        // Predicated region
        $region29: #{tpu_custom_call.1} parent=23 // pred_check
          %p165 = pneg %p101
        $region30: #{tpu_custom_call.1} parent=23 // pred_check_branch
          %167 = sbr.rel (%p165) target = $region32
        $region31: #{tpu_custom_call.1} parent=23 // pred_region
          %p168 = scmp.lt.s32.totalorder %s13, 1
          %s169 = scalar_select %p168, %s13, 1
          %s170 = scalar_lea.vmem %s3, %s169
        $region32: #{tpu_custom_call.1} parent=23 // pred_fallthru
          _
      $region24: #{tpu_custom_call.1} parent=5 // pred_fallthru
        _
      %p171 = scmp.le.s32.totalorder 1, %s13
      %p172 = scmp.lt.s32.totalorder %s13, 3
      %p173 = pnand %p171, %p172
      %p174 = pneg %p173
      // Predicated region
      $region33: #{tpu_custom_call.1} parent=5 // pred_check
        _
      $region34: #{tpu_custom_call.1} parent=5 // pred_check_branch
        %176 = sbr.rel (%p173) target = $region36
      $region35: #{tpu_custom_call.1} parent=5 // pred_region
        %s177 = ssub.s32 %s13, 1
        %p178 = scmp.lt.s32.totalorder %s18, 1
        %s179 = scalar_select %p178, %s18, 1
        %s180 = smul.addr %s179, 8
        %s181 = scalar_lea.vmem %s0, %s180
        %p182 = pneg %p39
        %p183 = pneg %p36
        %p184 = pneg %p60
        %p185 = pneg %p57
        %p186 = pneg %p81
        %p187 = pneg %p78
        %p188 = scmp.lt.s32.totalorder %s18, 1
        %s189 = scalar_select %p188, %s18, 1
        %s190 = scalar_lea.vmem %s3, %s189
        %p191 = pneg %p107
        %p192 = pneg %p104
        %p193 = pneg %p133
        %p194 = pneg %p130
        %s195 = sand.u32 %s120, 1
        %s196 = scalar_lea.sflag [#allocation3], %s195
        %s197 = sand.u32 %s120, 1
        %s198 = smul.addr %s197, 8
        %s199 = scalar_lea.vmem [#allocation2], %s198
        %p200 = scmp.lt.s32.totalorder %s18, 1
        %s201 = scalar_select %p200, %s18, 1
        %s202 = smul.addr %s201, 8
        %s203 = scalar_lea.vmem %s0, %s202
        %p204 = scmp.lt.s32.totalorder %s18, 1
        %s205 = scalar_select %p204, %s18, 1
        %s206 = scalar_lea.vmem %s3, %s205
        %v207 = vld [vmem:[%s203] sm:$0xff]
        %v208 = vld [vmem:[%s1] sm:$0xf]
        %v209 = vld [vmem:[%s2] sm:$0x1]
        %v211 = vlaneseq
        %v212 = vshrl.u32 %v211, 7
        %v213 = vsub.s32 0, %v212
        %v214 = vrot.slane %v209, %v213
        %vm216 = vcmask 31744
        %v218 = vsel %vm216, %v207, 0
        %vm220 = vcmask 1043456
        %v222 = vsel %vm220, %v208, 0
        %224 = vmatprep.subr.mxu0 0.0
        %225 = vmatpush1.msra.mxu0 0.0
        %226 = vmatprep.subr.mxu0 0.0
        %227 = vmatpush1.msra.mxu0 0.0
        %228 = vmatprep.subr.mxu0 0.0
        %229 = vmatpush1.msra.mxu0 0.0
        %230 = vmatprep.subr.mxu0 0.0
        %231 = vmatpush1.msra.mxu0 0.0
        %232 = vmatprep.subr.mxu0 0.0
        %233 = vmatpush1.msra.mxu0 0.0
        %234 = vmatprep.subr.mxu0 0.0
        %235 = vmatpush1.msra.mxu0 0.0
        %236 = vmatprep.subr.mxu0 0.0
        %237 = vmatpush1.msra.mxu0 0.0
        %238 = vmatprep.subr.mxu0 0.0
        %239 = vmatpush1.msra.mxu0 0.0
        %240 = vmatprep.subr.mxu0 0.0
        %241 = vmatpush1.msra.mxu0 0.0
        %242 = vmatprep.subr.mxu0 0.0
        %243 = vmatpush1.msra.mxu0 0.0
        %244 = vmatprep.subr.mxu0 0.0
        %245 = vmatpush1.msra.mxu0 0.0
        %246 = vmatprep.subr.mxu0 0.0
        %247 = vmatpush1.msra.mxu0 0.0
        %248 = vmatprep.subr.mxu0 0.0
        %249 = vmatpush1.msra.mxu0 0.0
        %250 = vmatprep.subr.mxu0 0.0
        %251 = vmatpush1.msra.mxu0 0.0
        %252 = vmatprep.subr.mxu0 0.0
        %253 = vmatpush1.msra.mxu0 0.0
        %254 = vmatprep.subr.mxu0 0.0
        %255 = vmatpush1.msra.mxu0 %v222
        %256 = vmatprep.subr.mxu0 0.0
        %257 = vmatpush2.msra.mxu0 0.0
        %258 = vmatprep.subr.mxu0 0.0
        %259 = vmatpush2.msra.mxu0 0.0
        %260 = vmatprep.subr.mxu0 0.0
        %261 = vmatpush2.msra.mxu0 0.0
        %262 = vmatprep.subr.mxu0 0.0
        %263 = vmatpush2.msra.mxu0 0.0
        %264 = vmatprep.subr.mxu0 0.0
        %265 = vmatpush2.msra.mxu0 0.0
        %266 = vmatprep.subr.mxu0 0.0
        %267 = vmatpush2.msra.mxu0 0.0
        %268 = vmatprep.subr.mxu0 0.0
        %269 = vmatpush2.msra.mxu0 0.0
        %270 = vmatprep.subr.mxu0 0.0
        %271 = vmatpush2.msra.mxu0 0.0
        %272 = vmatprep.subr.mxu0 0.0
        %273 = vmatpush2.msra.mxu0 0.0
        %274 = vmatprep.subr.mxu0 0.0
        %275 = vmatpush2.msra.mxu0 0.0
        %276 = vmatprep.subr.mxu0 0.0
        %277 = vmatpush2.msra.mxu0 0.0
        %278 = vmatprep.subr.mxu0 0.0
        %279 = vmatpush2.msra.mxu0 0.0
        %280 = vmatprep.subr.mxu0 0.0
        %281 = vmatpush2.msra.mxu0 0.0
        %282 = vmatprep.subr.mxu0 0.0
        %283 = vmatpush2.msra.mxu0 0.0
        %284 = vmatprep.subr.mxu0 0.0
        %285 = vmatpush2.msra.mxu0 0.0
        %286 = vmatprep.subr.mxu0 0.0
        %287 = vmatpush2.msra.mxu0 0.0
        %288 = vmatprep.mubr.f32.mxu0 0.0
        %289 = vmatmul.mubr.f32.gmra.mxu0 %v218
        %v290 = vpop.f32.mrf.mxu0
        %v291 = vadd.f32 %v214, %v290
        %v292 = vpop.f32.mrf.mxu0
        %293 = vdwg.mxu0
        %v294 = vld [vmem:[%s206] sm:$0x1]
        %v296 = vlaneseq
        %v297 = vshrl.u32 %v296, 7
        %v298 = vsub.s32 0, %v297
        %v299 = vrot.slane %v294, %v298
        %v301 = vadd.f32 %v291, %v299
        %302 = vst [vmem:[%s199] sm:$0xff] %v301
        %s303 = sand.u32 %s120, 1
        %s304 = scalar_lea.sflag [#allocation3], %s303
        %s305 = sand.u32 %s120, 1
        %s306 = smul.addr %s305, 8
        %s307 = scalar_lea.vmem [#allocation2], %s306
        // Predicated region
        $region37: #{tpu_custom_call.1} parent=35 // pred_check
          %p308 = pneg %p130
        $region38: #{tpu_custom_call.1} parent=35 // pred_check_branch
          %310 = sbr.rel (%p308) target = $region40
        $region39: #{tpu_custom_call.1} parent=35 // pred_region
          %s312 = ssub.s32 128, 128
          %313 = vsyncadd %s304, %s312
          %s314 = smul.addr %s18, 128
          %s315 = scalar_lea.hbm %s4, %s314
          %s317 = sshll.u32 %s307, 4
          %s318 = int_to_ptr.vmem [resolvable:$true] %s317
          %320 = dma.vmem_to_hbm [thread:$0]  %s318, 128, %s315, %s304
        $region40: #{tpu_custom_call.1} parent=35 // pred_fallthru
          _
      $region36: #{tpu_custom_call.1} parent=5 // pred_fallthru
        _
      %p321 = scmp.le.s32.totalorder 2, %s13
      // Predicated region
      $region41: #{tpu_custom_call.1} parent=5 // pred_check
        %p322 = pneg %p321
      $region42: #{tpu_custom_call.1} parent=5 // pred_check_branch
        %324 = sbr.rel (%p322) target = $region44
      $region43: #{tpu_custom_call.1} parent=5 // pred_region
        %s325 = ssub.s32 %s13, 2
        // Predicated region
        $region45: #{tpu_custom_call.1} parent=43 // pred_check
          %p326 = pneg %p136
        $region46: #{tpu_custom_call.1} parent=43 // pred_check_branch
          %328 = sbr.rel (%p326) target = $region48
        $region47: #{tpu_custom_call.1} parent=43 // pred_region
          %s329 = sand.u32 %s121, 1
          %s330 = scalar_lea.sflag [#allocation3], %s329
          %s331 = sand.u32 %s121, 1
          %s332 = smul.addr %s331, 8
          %s333 = scalar_lea.vmem [#allocation2], %s332
          %334 = dma.done %s330, 128
        $region48: #{tpu_custom_call.1} parent=43 // pred_fallthru
          _
      $region44: #{tpu_custom_call.1} parent=5 // pred_fallthru
        _
    $region6: #{tpu_custom_call.1} parent=1 // loop_footer
      %s17 = sadd.s32 1, %s13
    $region7: #{tpu_custom_call.1} parent=1 // loop_footer_branch
      %12 = sbr.rel target = $region3
    $region8: #{tpu_custom_call.1} parent=1 // loop_exit
      _
    %335 = vsyncpa [#allocation3], 1
    %s336 = scalar_lea.sflag [#allocation3], 1
    %337 = vsyncpa %s336, 1

</llo_original>
